<compile_context>
chip_gen: v7x
topology: tpu7x:2x2x1
jax: 0.10.0
libtpu: 0.0.40
codegen_flags: <defaults>
</compile_context>

<pallas_src>
import functools

import jax
import jax.numpy as jnp
from jax.experimental import pallas as pl
from jax.experimental.pallas import tpu as pltpu


def _round_up(v: int, m: int) -> int:
    return (v + m - 1) // m * m


def _adain_kernel(x_ref, y_ref, o_ref, *, hw: int, eps: float):
    # x_ref / y_ref / o_ref are (TR, HW) row tiles; all stats are per row, so a
    # clipped (ragged) last block is safe: garbage rows never affect real rows.
    # TODO(synk): for bf16 inputs on v6e/v7x, do the apply in bf16 with (TR,1)
    # scale/shift to avoid the two full-tile f32 copies; f32 inputs are a no-op.
    x = x_ref[...].astype(jnp.float32)
    y = y_ref[...].astype(jnp.float32)

    inv_n = 1.0 / float(hw)
    inv_denom = 1.0 / float(hw - 1) if hw > 1 else 1.0  # torch unbiased var

    x_mean = jnp.sum(x, axis=-1, keepdims=True) * inv_n
    y_mean = jnp.sum(y, axis=-1, keepdims=True) * inv_n

    # Two-pass (centered) variance for numerics; no masking needed.
    xc = x - x_mean
    yc = y - y_mean
    x_var = jnp.sum(xc * xc, axis=-1, keepdims=True) * inv_denom + eps
    y_var = jnp.sum(yc * yc, axis=-1, keepdims=True) * inv_denom + eps

    # out = std(y) * (x - mean(x)) / std(x) + mean(y)
    #     = x * scale + shift
    scale = jnp.sqrt(y_var) * jax.lax.rsqrt(x_var)   # (TR, 1) — cheap EUP work
    shift = y_mean - x_mean * scale
    o_ref[...] = (x * scale + shift).astype(o_ref.dtype)


def adain(x: jax.Array, y: jax.Array, epsilon: float = 1e-5) -> jax.Array:
    """AdaIN forward. x, y: (N, C, H, W) with identical shapes."""
    assert x.shape == y.shape and x.ndim == 4
    N, C, H, W = x.shape
    HW = H * W
    R = N * C

    x2 = x.reshape(R, HW)
    y2 = y.reshape(R, HW)

    itemsize = jnp.dtype(x.dtype).itemsize
    hw_lanes = _round_up(HW, 128)  # actual per-row VMEM footprint (lane padding)

    # Generation-aware VMEM budget (v5e/v6e: 128 MiB, v7x: 64 MiB).
    try:
        vmem_cap = int(pltpu.get_tpu_info().vmem_capacity_bytes)
    except Exception:
        vmem_cap = 64 * 1024 * 1024

    # Per-row VMEM cost: 6 pipeline buffers (x, y, out, double-buffered, input
    # dtype) + ~4 full-tile f32 temporaries inside the kernel body.
    bytes_per_row = 6 * hw_lanes * itemsize + 4 * hw_lanes * 4
    budget_bytes = int(vmem_cap * 0.65)

    tr_budget = max(8, (budget_bytes // bytes_per_row) // 8 * 8)
    # ~2 MiB per block per array amortizes the ~0.35 us per-step overhead.
    tr_block = max(8, ((2 * 1024 * 1024) // (hw_lanes * itemsize)) // 8 * 8)
    # Keep >= ~8 grid steps when R allows, so megacore sharding + pipelining work.
    tr_steps = max(8, _round_up(pl.cdiv(R, 8), 8))

    if R < 8:
        TR = R  # full-array second-to-last dim is always a legal block dim
    else:
        TR = min(tr_budget, tr_block, tr_steps)
    # TODO(synk): for extreme HW (f32 rows that don't fit even with TR=8) a
    # two-pass (HW-chunked reduction + apply) structure is needed.

    grid = (pl.cdiv(R, TR),)  # ragged last block is clipped; per-row stats => safe

    kernel = functools.partial(_adain_kernel, hw=HW, eps=epsilon)

    out = pl.pallas_call(
        kernel,
        out_shape=jax.ShapeDtypeStruct((R, HW), x.dtype),
        grid_spec=pltpu.PrefetchScalarGridSpec(
            num_scalar_prefetch=0,
            grid=grid,
            in_specs=[
                pl.BlockSpec((TR, HW), lambda r: (r, 0)),
                pl.BlockSpec((TR, HW), lambda r: (r, 0)),
            ],
            out_specs=pl.BlockSpec((TR, HW), lambda r: (r, 0)),
        ),
        compiler_params=pltpu.CompilerParams(
            dimension_semantics=("parallel",),
            vmem_limit_bytes=min(int(vmem_cap * 0.85), 100 * 1024 * 1024),
        ),
    )(x2, y2)

    return out.reshape(N, C, H, W)


def _adain_reference(x, y, epsilon=1e-5):
    """Pure-JAX reference matching the PyTorch module (unbiased var)."""
    N, C, H, W = x.shape
    xf = x.reshape(N, C, -1).astype(jnp.float32)
    yf = y.reshape(N, C, -1).astype(jnp.float32)

    def mean_std(f):
        m = jnp.mean(f, axis=2)
        v = jnp.var(f, axis=2, ddof=1) + epsilon
        return m.reshape(N, C, 1, 1), jnp.sqrt(v).reshape(N, C, 1, 1)

    cm, cs = mean_std(xf)
    yb, yg = mean_std(yf)
    return (yg * (x.astype(jnp.float32) - cm) / cs + yb).astype(x.dtype)


if __name__ == "__main__":
    key = jax.random.PRNGKey(0)
    kx, ky = jax.random.split(key)

    # Main case: lane-dense HW (16*16 = 256), R = 8.
    N, C, H, W = 2, 4, 16, 16
    x = jax.random.normal(kx, (N, C, H, W), dtype=jnp.float32)
    y = jax.random.normal(ky, (N, C, H, W), dtype=jnp.float32) * 2.0 + 0.5

    out = adain(x, y)
    jax.block_until_ready(out)
    ref = _adain_reference(x, y)
    assert out.shape == (N, C, H, W)
    assert jnp.allclose(out, ref, atol=1e-4, rtol=1e-4), (
        f"max abs err {jnp.max(jnp.abs(out - ref))}"
    )

    # HW not a multiple of 128 (7*7 = 49): full-array last block dim, no padding.
    x2 = jax.random.normal(kx, (2, 4, 7, 7), dtype=jnp.float32)
    y2 = jax.random.normal(ky, (2, 4, 7, 7), dtype=jnp.float32) * 1.5 - 0.25
    out2 = adain(x2, y2)
    jax.block_until_ready(out2)
    ref2 = _adain_reference(x2, y2)
    assert jnp.allclose(out2, ref2, atol=1e-4, rtol=1e-4), (
        f"max abs err (non-128 HW) {jnp.max(jnp.abs(out2 - ref2))}"
    )

    # Ragged rows: R = 3*5 = 15 not a multiple of TR=8 -> clipped last block.
    x3 = jax.random.normal(kx, (3, 5, 16, 8), dtype=jnp.float32) + 1.0
    y3 = jax.random.normal(ky, (3, 5, 16, 8), dtype=jnp.float32) * 0.7
    out3 = adain(x3, y3)
    jax.block_until_ready(out3)
    ref3 = _adain_reference(x3, y3)
    assert jnp.allclose(out3, ref3, atol=1e-4, rtol=1e-4), (
        f"max abs err (ragged rows) {jnp.max(jnp.abs(out3 - ref3))}"
    )

    print("KERNEL_OK")
</pallas_src>

<mosaic_0001>
module attributes {stable_mosaic.version = 11 : i64} {
  func.func @_adain_kernel(%arg0: i32, %arg1: memref<8x256xf32, #tpu.memory_space<vmem>>, %arg2: memref<8x256xf32, #tpu.memory_space<vmem>>, %arg3: memref<8x256xf32, #tpu.memory_space<vmem>>) attributes {dimension_semantics = [#tpu.dimension_semantics<parallel>], iteration_bounds = array<i64: 1>, scalar_prefetch = 0 : i64, scratch_operands = 0 : i64, tpu.core_type = #tpu.core_type<tc>, window_params = [{transform_indices = @transform_0, window_bounds = array<i64: 8, 256>}, {transform_indices = @transform_1, window_bounds = array<i64: 8, 256>}, {transform_indices = @transform_2, window_bounds = array<i64: 8, 256>}]} {
    %c0 = arith.constant 0 : index
    %c0_0 = arith.constant 0 : index
    %0 = vector.load %arg1[%c0, %c0_0] : memref<8x256xf32, #tpu.memory_space<vmem>>, vector<8x256xf32>
    %c0_1 = arith.constant 0 : index
    %c0_2 = arith.constant 0 : index
    %1 = vector.load %arg2[%c0_1, %c0_2] : memref<8x256xf32, #tpu.memory_space<vmem>>, vector<8x256xf32>
    %cst = arith.constant dense<0.000000e+00> : vector<8xf32>
    %2 = vector.multi_reduction <add>, %0, %cst [1] : vector<8x256xf32> to vector<8xf32>
    %3 = vector.shape_cast %2 : vector<8xf32> to vector<8x1xf32>
    %cst_3 = arith.constant 3.906250e-03 : f32
    %4 = vector.broadcast %cst_3 : f32 to vector<8x1xf32>
    %5 = arith.mulf %3, %4 : vector<8x1xf32>
    %cst_4 = arith.constant dense<0.000000e+00> : vector<8xf32>
    %6 = vector.multi_reduction <add>, %1, %cst_4 [1] : vector<8x256xf32> to vector<8xf32>
    %7 = vector.shape_cast %6 : vector<8xf32> to vector<8x1xf32>
    %cst_5 = arith.constant 3.906250e-03 : f32
    %8 = vector.broadcast %cst_5 : f32 to vector<8x1xf32>
    %9 = arith.mulf %7, %8 : vector<8x1xf32>
    %10 = vector.broadcast %5 : vector<8x1xf32> to vector<8x256xf32>
    %11 = arith.subf %0, %10 : vector<8x256xf32>
    %12 = vector.broadcast %9 : vector<8x1xf32> to vector<8x256xf32>
    %13 = arith.subf %1, %12 : vector<8x256xf32>
    %14 = arith.mulf %11, %11 : vector<8x256xf32>
    %cst_6 = arith.constant dense<0.000000e+00> : vector<8xf32>
    %15 = vector.multi_reduction <add>, %14, %cst_6 [1] : vector<8x256xf32> to vector<8xf32>
    %16 = vector.shape_cast %15 : vector<8xf32> to vector<8x1xf32>
    %cst_7 = arith.constant 0.00392156886 : f32
    %17 = vector.broadcast %cst_7 : f32 to vector<8x1xf32>
    %18 = arith.mulf %16, %17 : vector<8x1xf32>
    %cst_8 = arith.constant 9.99999974E-6 : f32
    %19 = vector.broadcast %cst_8 : f32 to vector<8x1xf32>
    %20 = arith.addf %18, %19 : vector<8x1xf32>
    %21 = arith.mulf %13, %13 : vector<8x256xf32>
    %cst_9 = arith.constant dense<0.000000e+00> : vector<8xf32>
    %22 = vector.multi_reduction <add>, %21, %cst_9 [1] : vector<8x256xf32> to vector<8xf32>
    %23 = vector.shape_cast %22 : vector<8xf32> to vector<8x1xf32>
    %cst_10 = arith.constant 0.00392156886 : f32
    %24 = vector.broadcast %cst_10 : f32 to vector<8x1xf32>
    %25 = arith.mulf %23, %24 : vector<8x1xf32>
    %cst_11 = arith.constant 9.99999974E-6 : f32
    %26 = vector.broadcast %cst_11 : f32 to vector<8x1xf32>
    %27 = arith.addf %25, %26 : vector<8x1xf32>
    %28 = math.sqrt %27 : vector<8x1xf32>
    %29 = math.rsqrt %20 : vector<8x1xf32>
    %30 = arith.mulf %28, %29 : vector<8x1xf32>
    %31 = arith.mulf %5, %30 : vector<8x1xf32>
    %32 = arith.subf %9, %31 : vector<8x1xf32>
    %33 = vector.broadcast %30 : vector<8x1xf32> to vector<8x256xf32>
    %34 = arith.mulf %0, %33 : vector<8x256xf32>
    %35 = vector.broadcast %32 : vector<8x1xf32> to vector<8x256xf32>
    %36 = arith.addf %34, %35 : vector<8x256xf32>
    %c0_12 = arith.constant 0 : index
    %c0_13 = arith.constant 0 : index
    %37 = vector.load %arg3[%c0_12, %c0_13] : memref<8x256xf32, #tpu.memory_space<vmem>>, vector<8x256xf32>
    tpu.vector_store %arg3[%c0_12, %c0_13], %36 {strides = array<i32>} : memref<8x256xf32, #tpu.memory_space<vmem>>, vector<8x256xf32>,
    return
  }
  func.func @transform_0(%arg0: i32) -> (i32, i32) {
    %c0_i32 = arith.constant 0 : i32
    %c0_i32_0 = arith.constant 0 : i32
    return %arg0, %c0_i32 : i32, i32
  }
  func.func @transform_1(%arg0: i32) -> (i32, i32) {
    %c0_i32 = arith.constant 0 : i32
    %c0_i32_0 = arith.constant 0 : i32
    return %arg0, %c0_i32 : i32, i32
  }
  func.func @transform_2(%arg0: i32) -> (i32, i32) {
    %c0_i32 = arith.constant 0 : i32
    %c0_i32_0 = arith.constant 0 : i32
    return %arg0, %c0_i32 : i32, i32
  }
}

</mosaic_0001>

<llo_original>
// kernel: tpu_custom_call.1
$region0: #{tpu_custom_call.1}
  #allocation0 [shape = 'u32[]', space=smem, size = 0x4, offset = 0x4, fixed_abs, tag = 'smem constant byte address 0x4 - core index']
  #allocation1 [shape = 'u32[144,128]{1,0:T(1,128)}', space=vmem, size = 0x12000, scoped, tag = 'internal scratch']
  %s0 = inlined_call_operand.hbm [shape: f32[8,256], index: 0, kind: input, shape index: {}]
  %s1 = inlined_call_operand.hbm [shape: f32[8,256], index: 1, kind: input, shape index: {}]
  %s2 = inlined_call_operand.hbm [shape: f32[8,256], index: 2, kind: output, shape index: {}]
  %s3 = sld [smem:[#allocation0]]
  $region26: #{tpu_custom_call.1} parent=0
    _
  %s5 = ssub.s32 1, %s3
  %s6 = scalar_select 0, %s5, %s3
  $region1: #{tpu_custom_call.1} parent=0
    #allocation2 [shape = 'u8[8192]{0}', space=vmem, size = 0x2000, scoped, tag = 'input window, operand 0, single buffered']
    #allocation3 [shape = 's32[1]{0}', space=sflag, size = 0x4, scoped, tag = 'scoped memory for tpu_custom_call.1']
    #allocation4 [shape = 's32[1]{0}', space=sflag, size = 0x4, scoped, tag = 'scoped memory for tpu_custom_call.1']
    #allocation5 [shape = 'u8[8192]{0}', space=vmem, size = 0x2000, scoped, tag = 'input window, operand 1, single buffered']
    #allocation6 [shape = 's32[1]{0}', space=sflag, size = 0x4, scoped, tag = 'scoped memory for tpu_custom_call.1']
    #allocation7 [shape = 'u8[8192]{0}', space=vmem, size = 0x2000, scoped, tag = 'output window, operand 0, single buffered']
    %7 = vsyncpa [#allocation3], 0
    %8 = vsyncpa [#allocation6], 0
    %9 = vsyncpa [#allocation4], 0
    // Predicated region
    $region2: #{tpu_custom_call.1} parent=1 // pred_check
      _
    $region3: #{tpu_custom_call.1} parent=1 // pred_check_branch
      %11 = sbr.rel (0) target = $region5
    $region4: #{tpu_custom_call.1} parent=1 // pred_region
      %s13 = ssub.s32 256, 256
      %14 = vsyncadd [#allocation3], %s13
      %s16 = sshll.u32 [#allocation2], 4
      %s17 = int_to_ptr.vmem [resolvable:$true] %s16
      %19 = dma.hbm_to_vmem [thread:$0]  %s0, 256, %s17, [#allocation3]
    $region5: #{tpu_custom_call.1} parent=1 // pred_fallthru
      _
    // Predicated region
    $region6: #{tpu_custom_call.1} parent=1 // pred_check
      _
    $region7: #{tpu_custom_call.1} parent=1 // pred_check_branch
      %21 = sbr.rel (0) target = $region9
    $region8: #{tpu_custom_call.1} parent=1 // pred_region
      %s23 = ssub.s32 256, 256
      %24 = vsyncadd [#allocation6], %s23
      %s26 = sshll.u32 [#allocation5], 4
      %s27 = int_to_ptr.vmem [resolvable:$true] %s26
      %29 = dma.hbm_to_vmem [thread:$0]  %s1, 256, %s27, [#allocation6]
    $region9: #{tpu_custom_call.1} parent=1 // pred_fallthru
      _
    // Predicated region
    $region10: #{tpu_custom_call.1} parent=1 // pred_check
      _
    $region11: #{tpu_custom_call.1} parent=1 // pred_check_branch
      %31 = sbr.rel (0) target = $region13
    $region12: #{tpu_custom_call.1} parent=1 // pred_region
      %32 = dma.done [#allocation3], 256
    $region13: #{tpu_custom_call.1} parent=1 // pred_fallthru
      _
    // Predicated region
    $region14: #{tpu_custom_call.1} parent=1 // pred_check
      _
    $region15: #{tpu_custom_call.1} parent=1 // pred_check_branch
      %34 = sbr.rel (0) target = $region17
    $region16: #{tpu_custom_call.1} parent=1 // pred_region
      %35 = dma.done [#allocation6], 256
    $region17: #{tpu_custom_call.1} parent=1 // pred_fallthru
      _
    %v36 = vld [vmem:[#allocation2] sm:$0xff]
    %v37 = vld [vmem:[#allocation2 + $0x8] sm:$0xff]
    %v38 = vld [vmem:[#allocation5] sm:$0xff]
    %v39 = vld [vmem:[#allocation5 + $0x8] sm:$0xff]
    %v40 = vadd.f32 %v36, %v37
    %41 = vadd.xlane.f32.xlu0 %v40
    %v42 = vpop.xlane.xlu0 %41
    %v43 = vmul.f32 %v42, 0.00390625
    %v44 = vadd.f32 %v38, %v39
    %45 = vadd.xlane.f32.xlu0 %v44
    %v46 = vpop.xlane.xlu0 %45
    %v47 = vmul.f32 %v46, 0.00390625
    %v48 = vsub.f32 %v36, %v43
    %v49 = vsub.f32 %v37, %v43
    %v50 = vsub.f32 %v38, %v47
    %v51 = vsub.f32 %v39, %v47
    %v52 = vmul.f32 %v48, %v48
    %v53 = vmul.f32 %v49, %v49
    %v54 = vadd.f32 %v52, %v53
    %55 = vadd.xlane.f32.xlu0 %v54
    %v56 = vpop.xlane.xlu0 %55
    %v57 = vmul.f32 %v56, 0.003921569
    %v58 = vadd.f32 %v57, 1e-05
    %v59 = vmul.f32 %v50, %v50
    %v60 = vmul.f32 %v51, %v51
    %v61 = vadd.f32 %v59, %v60
    %62 = vadd.xlane.f32.xlu0 %v61
    %v63 = vpop.xlane.xlu0 %62
    %v64 = vmul.f32 %v63, 0.003921569
    %v65 = vadd.f32 %v64, 1e-05
    %v66 = vrsqrt.pop %v65
    %v67 = vmul.f32 %v65, %v66
    %vm68 = vcmp.eq.f32.partialorder %v65, inf
    %v69 = vsel %vm68, %v65, %v67
    %vm70 = vcmp.eq.f32.partialorder %v65, 0.0
    %v71 = vand.u32 %v65, 2147483648
    %v72 = vsel %vm70, %v71, %v69
    %v73 = vrsqrt.pop %v58
    %v74 = vmul.f32 %v72, %v73
    %v75 = vmul.f32 %v43, %v74
    %v76 = vsub.f32 %v47, %v75
    %v77 = vmul.f32 %v36, %v74
    %v78 = vmul.f32 %v37, %v74
    %v79 = vadd.f32 %v77, %v76
    %v80 = vadd.f32 %v78, %v76
    %81 = vst [vmem:[#allocation7] sm:$0xff] %v79
    %82 = vst [vmem:[#allocation7 + $0x8] sm:$0xff] %v80
    // Predicated region
    $region18: #{tpu_custom_call.1} parent=1 // pred_check
      _
    $region19: #{tpu_custom_call.1} parent=1 // pred_check_branch
      %84 = sbr.rel (0) target = $region21
    $region20: #{tpu_custom_call.1} parent=1 // pred_region
      %s86 = ssub.s32 256, 256
      %87 = vsyncadd [#allocation4], %s86
      %s89 = sshll.u32 [#allocation7], 4
      %s90 = int_to_ptr.vmem [resolvable:$true] %s89
      %92 = dma.vmem_to_hbm [thread:$0]  %s90, 256, %s2, [#allocation4]
    $region21: #{tpu_custom_call.1} parent=1 // pred_fallthru
      _
    // Predicated region
    $region22: #{tpu_custom_call.1} parent=1 // pred_check
      _
    $region23: #{tpu_custom_call.1} parent=1 // pred_check_branch
      %94 = sbr.rel (0) target = $region25
    $region24: #{tpu_custom_call.1} parent=1 // pred_region
      %95 = dma.done [#allocation4], 256
    $region25: #{tpu_custom_call.1} parent=1 // pred_fallthru
      _
    %96 = vsyncpa [#allocation3], 1
    %97 = vsyncpa [#allocation6], 1
    %98 = vsyncpa [#allocation4], 1

</llo_original>
